<compile_context>
chip_gen: v5e
topology: v5e:2x2
jax: 0.10.0
libtpu: 0.0.40
codegen_flags: <defaults>
</compile_context>

<pallas_src>
import jax
import jax.numpy as jnp
from jax import lax
from jax.experimental import pallas as pl
from jax.experimental.pallas import tpu as pltpu


def _sigmoid_via_tanh(x):
    # sigmoid(x) == 0.5 * (1 + tanh(0.5 * x)); single EUP op per element.
    return 0.5 * (1.0 + jnp.tanh(0.5 * x))


# --------------------------- stage 1: question branch --------------------------------


def _question_branch_kernel(q_ref, wtf_ref, btf_ref, wtg_ref, btg_ref, wlc_ref, qw_ref):
    # q_ref:   (B, D_txt)      bf16, full batch -> one well-shaped MXU matmul
    # w*_ref:  (D_txt, tile_h) bf16 chunk of the fused 2H axis
    # b*_ref:  (1, tile_h)     f32
    # wlc_ref: (1, tile_h)     f32
    # qw_ref:  (B, tile_h)     f32 output chunk of GatedTanh(q) * wlc
    q = q_ref[...]
    lin = jnp.dot(q, wtf_ref[...], preferred_element_type=jnp.float32) + btf_ref[...]
    gate = jnp.dot(q, wtg_ref[...], preferred_element_type=jnp.float32) + btg_ref[...]
    qw_ref[...] = (jnp.tanh(lin) * _sigmoid_via_tanh(gate)) * wlc_ref[...]


# --------------------------- stage 2: image branch + softmax --------------------------


def _double_project_attention_kernel(
    img_ref,     # (L, D_img)      bf16 per-batch tile (batch dim squeezed)
    wif_ref,     # (D_img, tile_h) bf16 chunk, fa_image.fc (att1 || att2)
    bif_ref,     # (1, tile_h)     f32
    wig_ref,     # (D_img, tile_h) bf16 chunk, fa_image.gate_fc
    big_ref,     # (1, tile_h)     f32
    qw_ref,      # (B, tile_h)     f32 chunk of GatedTanh(q) * wlc
    blc_ref,     # (1, 1)          f32, lc bias (b1 + b2)
    out_ref,     # (L, 1)          f32 per-batch attention weights
    raw_acc,     # (L, 1)          f32 VMEM scratch accumulator over the 2H axis
):
    b = pl.program_id(0)
    k = pl.program_id(1)

    @pl.when(k == 0)
    def _init():
        raw_acc[...] = jnp.zeros_like(raw_acc)

    # GatedTanh on image features for this 2H chunk (bf16 MXU, f32 accumulate).
    img = img_ref[...]
    lin = jnp.dot(img, wif_ref[...], preferred_element_type=jnp.float32) + bif_ref[...]
    gate = jnp.dot(img, wig_ref[...], preferred_element_type=jnp.float32) + big_ref[...]
    image_fa = jnp.tanh(lin) * _sigmoid_via_tanh(gate)          # (L, tile_h) f32

    # raw += image_fa @ (question_fa * wlc)^T  -- MXU matvec, contracts tile_h.
    qw_row = qw_ref[pl.ds(b, 1), :]                             # (1, tile_h) f32
    raw_acc[...] += lax.dot_general(
        image_fa, qw_row,
        dimension_numbers=(((1,), (1,)), ((), ())),
        preferred_element_type=jnp.float32)                     # (L, 1)

    @pl.when(k == pl.num_programs(1) - 1)
    def _finalize():
        raw = raw_acc[...] + blc_ref[0, 0]                      # shift-invariant, kept for fidelity
        m = jnp.max(raw, axis=0, keepdims=True)
        e = jnp.exp(raw - m)
        w = e * pl.reciprocal(jnp.sum(e, axis=0, keepdims=True), approx=True)
        out_ref[...] = w.astype(out_ref.dtype)


# ------------------------------------ wrapper -----------------------------------------


def _pick_tile_h(h2, max_tile=1024):
    """Largest tile <= max_tile that divides 2H; multiple of 128 when tiling is needed."""
    if h2 <= max_tile:
        return h2
    t = max_tile - (max_tile % 128)
    while t >= 128:
        if h2 % t == 0:
            return t
        t -= 128
    return h2  # fallback: no tiling (2H not factorable into 128-multiples)


def double_project_attention(image_feat, question_embedding, params, *, max_tile_h=1024):
    """image_feat: (B, L, D_img), question_embedding: (B, D_txt) -> (B, L, D_img)."""
    B, L, D_img = image_feat.shape
    _, D_txt = question_embedding.shape
    H2 = params["wif"].shape[1]          # 2 * hidden_size (fused branches)
    tile_h = _pick_tile_h(H2, max_tile_h)
    K = H2 // tile_h

    # bf16 at the boundary for the big matmuls; f32 accumulation inside.
    wdt = jnp.bfloat16
    img = image_feat.astype(wdt)
    q = question_embedding.astype(wdt)
    wif = params["wif"].astype(wdt)
    wig = params["wig"].astype(wdt)
    wtf = params["wtf"].astype(wdt)
    wtg = params["wtg"].astype(wdt)
    bif = params["bif"].astype(jnp.float32)
    big_ = params["big"].astype(jnp.float32)
    btf = params["btf"].astype(jnp.float32)
    btg = params["btg"].astype(jnp.float32)
    wlc = params["wlc"].astype(jnp.float32)
    blc = params["blc"].astype(jnp.float32)

    vmem_limit = 64 * 1024 * 1024  # sized for bounded per-chunk tiles; fits v7x 64 MiB budget

    # ---- stage 1: qw = GatedTanh(question) * wlc, all batches at once, tiled over 2H.
    qw = pl.pallas_call(
        _question_branch_kernel,
        out_shape=jax.ShapeDtypeStruct((B, H2), jnp.float32),
        grid_spec=pltpu.PrefetchScalarGridSpec(
            num_scalar_prefetch=0,
            grid=(K,),
            in_specs=[
                pl.BlockSpec((B, D_txt), lambda k: (0, 0)),
                pl.BlockSpec((D_txt, tile_h), lambda k: (0, k)),
                pl.BlockSpec((1, tile_h), lambda k: (0, k)),
                pl.BlockSpec((D_txt, tile_h), lambda k: (0, k)),
                pl.BlockSpec((1, tile_h), lambda k: (0, k)),
                pl.BlockSpec((1, tile_h), lambda k: (0, k)),
            ],
            out_specs=pl.BlockSpec((B, tile_h), lambda k: (0, k)),
        ),
        compiler_params=pltpu.CompilerParams(
            dimension_semantics=("parallel",),
            vmem_limit_bytes=vmem_limit,
        ),
    )(q, wtf, btf, wtg, btg, wlc)

    # ---- stage 2: per-batch image GatedTanh chunks, accumulate raw, softmax over L.
    sq = pl.Squeezed()
    attn = pl.pallas_call(
        _double_project_attention_kernel,
        out_shape=jax.ShapeDtypeStruct((B, L, 1), jnp.float32),
        grid_spec=pltpu.PrefetchScalarGridSpec(
            num_scalar_prefetch=0,
            grid=(B, K),
            in_specs=[
                pl.BlockSpec((sq, L, D_img), lambda b, k: (b, 0, 0)),   # image_feat (per batch)
                pl.BlockSpec((D_img, tile_h), lambda b, k: (0, k)),     # wif chunk
                pl.BlockSpec((1, tile_h), lambda b, k: (0, k)),         # bif chunk
                pl.BlockSpec((D_img, tile_h), lambda b, k: (0, k)),     # wig chunk
                pl.BlockSpec((1, tile_h), lambda b, k: (0, k)),         # big chunk
                pl.BlockSpec((B, tile_h), lambda b, k: (0, k)),         # qw chunk (all batches)
                pl.BlockSpec((1, 1), lambda b, k: (0, 0)),              # blc
            ],
            out_specs=pl.BlockSpec((sq, L, 1), lambda b, k: (b, 0, 0)),
            scratch_shapes=[pltpu.VMEM((L, 1), jnp.float32)],
        ),
        compiler_params=pltpu.CompilerParams(
            dimension_semantics=("parallel", "arbitrary"),
            vmem_limit_bytes=vmem_limit,
        ),
    )(img, wif, bif, wig, big_, qw, blc)

    # expand_as(image_feat): broadcast in XLA (cheap / fusable), not in the kernel.
    return jnp.broadcast_to(attn, image_feat.shape).astype(image_feat.dtype)


# ---------------- parameter construction (deterministic, PyTorch-convention shapes) ----------


def init_params(key, image_feat_dim, txt_dim, hidden_size):
    """Build weights for att1 and att2 and fuse them along the hidden axis."""
    ks = jax.random.split(key, 20)
    i = iter(range(20))

    def linear(kw, kb, out_dim, in_dim, scale=0.1):
        w = scale * jax.random.normal(kw, (out_dim, in_dim), jnp.float32)   # PyTorch (out, in)
        b = scale * jax.random.normal(kb, (out_dim,), jnp.float32)
        return w, b

    def branch():
        wif, bif = linear(ks[next(i)], ks[next(i)], hidden_size, image_feat_dim)
        wig, big = linear(ks[next(i)], ks[next(i)], hidden_size, image_feat_dim)
        wtf, btf = linear(ks[next(i)], ks[next(i)], hidden_size, txt_dim)
        wtg, btg = linear(ks[next(i)], ks[next(i)], hidden_size, txt_dim)
        wlc, blc = linear(ks[next(i)], ks[next(i)], 1, hidden_size)
        return dict(wif=wif, bif=bif, wig=wig, big=big,
                    wtf=wtf, btf=btf, wtg=wtg, btg=btg, wlc=wlc, blc=blc)

    a1, a2 = branch(), branch()

    def cat_t(name):   # transpose to (in, out) and concat branch1 || branch2 along out
        return jnp.concatenate([a1[name].T, a2[name].T], axis=-1)

    def cat_b(name):
        return jnp.concatenate([a1[name], a2[name]], axis=-1)[None, :]

    fused = {
        "wif": cat_t("wif"), "bif": cat_b("bif"),
        "wig": cat_t("wig"), "big": cat_b("big"),
        "wtf": cat_t("wtf"), "btf": cat_b("btf"),
        "wtg": cat_t("wtg"), "btg": cat_b("btg"),
        "wlc": jnp.concatenate([a1["wlc"], a2["wlc"]], axis=-1),          # (1, 2H)
        "blc": (a1["blc"] + a2["blc"]).reshape(1, 1),                     # (1, 1)
    }
    return fused, (a1, a2)


def reference_forward(image_feat, q, branches):
    """Pure-JAX f32 reference matching the PyTorch module (eval mode)."""
    def gated_tanh(x, wf, bf, wg, bg):
        return jnp.tanh(x @ wf.T + bf) * jax.nn.sigmoid(x @ wg.T + bg)

    def raw_att(p):
        img_fa = gated_tanh(image_feat, p["wif"], p["bif"], p["wig"], p["big"])   # (B,L,H)
        q_fa = gated_tanh(q, p["wtf"], p["btf"], p["wtg"], p["btg"])              # (B,H)
        joint = img_fa * q_fa[:, None, :]
        return joint @ p["wlc"].T + p["blc"]                                      # (B,L,1)

    a1, a2 = branches
    raw = raw_att(a1) + raw_att(a2)
    w = jax.nn.softmax(raw, axis=1)
    return jnp.broadcast_to(w, image_feat.shape)


if __name__ == "__main__":
    B, L, D_IMG, D_TXT, H = 2, 16, 32, 16, 32

    key = jax.random.PRNGKey(0)
    k_img, k_q, k_p = jax.random.split(key, 3)
    image_feat = jax.random.normal(k_img, (B, L, D_IMG), jnp.float32)
    question_embedding = jax.random.normal(k_q, (B, D_TXT), jnp.float32)

    fused_params, branches = init_params(k_p, D_IMG, D_TXT, H)

    out = double_project_attention(image_feat, question_embedding, fused_params)
    out = jax.block_until_ready(out)

    ref = reference_forward(image_feat, question_embedding, branches)
    assert out.shape == image_feat.shape
    # bf16 weights/activations + approx softmax reciprocal: relaxed tolerance vs f32 reference.
    assert jnp.allclose(out, ref, atol=1e-2, rtol=1e-2), "mismatch vs pure-JAX reference"

    print("KERNEL_OK")
</pallas_src>

<mosaic_0001>
module attributes {stable_mosaic.version = 11 : i64} {
  func.func @_question_branch_kernel(%arg0: i32, %arg1: memref<2x16xbf16, #tpu.memory_space<vmem>>, %arg2: memref<16x64xbf16, #tpu.memory_space<vmem>>, %arg3: memref<1x64xf32, #tpu.memory_space<vmem>>, %arg4: memref<16x64xbf16, #tpu.memory_space<vmem>>, %arg5: memref<1x64xf32, #tpu.memory_space<vmem>>, %arg6: memref<1x64xf32, #tpu.memory_space<vmem>>, %arg7: memref<2x64xf32, #tpu.memory_space<vmem>>) attributes {dimension_semantics = [#tpu.dimension_semantics<parallel>], iteration_bounds = array<i64: 1>, scalar_prefetch = 0 : i64, scratch_operands = 0 : i64, tpu.core_type = #tpu.core_type<tc>, window_params = [{pipeline_mode = #tpu.pipeline_mode<synchronous>, transform_indices = @transform_0, window_bounds = array<i64: 2, 16>}, {transform_indices = @transform_1, window_bounds = array<i64: 16, 64>}, {transform_indices = @transform_2, window_bounds = array<i64: 1, 64>}, {transform_indices = @transform_3, window_bounds = array<i64: 16, 64>}, {transform_indices = @transform_4, window_bounds = array<i64: 1, 64>}, {transform_indices = @transform_5, window_bounds = array<i64: 1, 64>}, {transform_indices = @transform_6, window_bounds = array<i64: 2, 64>}]} {
    %c0 = arith.constant 0 : index
    %c0_0 = arith.constant 0 : index
    %0 = vector.load %arg1[%c0, %c0_0] : memref<2x16xbf16, #tpu.memory_space<vmem>>, vector<2x16xbf16>
    %c0_1 = arith.constant 0 : index
    %c0_2 = arith.constant 0 : index
    %1 = vector.load %arg2[%c0_1, %c0_2] : memref<16x64xbf16, #tpu.memory_space<vmem>>, vector<16x64xbf16>
    %cst = arith.constant dense<0.000000e+00> : vector<2x64xf32>
    %2 = tpu.matmul %0, %1, %cst {dimension_numbers = #tpu.dot_dimension_numbers<[1], [0], [0], [1], [0, 0, 1, 1], [], []>} : vector<2x16xbf16>, vector<16x64xbf16>, vector<2x64xf32> -> vector<2x64xf32>
    %c0_3 = arith.constant 0 : index
    %c0_4 = arith.constant 0 : index
    %3 = vector.load %arg3[%c0_3, %c0_4] : memref<1x64xf32, #tpu.memory_space<vmem>>, vector<1x64xf32>
    %4 = vector.broadcast %3 : vector<1x64xf32> to vector<2x64xf32>
    %5 = arith.addf %2, %4 : vector<2x64xf32>
    %c0_5 = arith.constant 0 : index
    %c0_6 = arith.constant 0 : index
    %6 = vector.load %arg4[%c0_5, %c0_6] : memref<16x64xbf16, #tpu.memory_space<vmem>>, vector<16x64xbf16>
    %cst_7 = arith.constant dense<0.000000e+00> : vector<2x64xf32>
    %7 = tpu.matmul %0, %6, %cst_7 {dimension_numbers = #tpu.dot_dimension_numbers<[1], [0], [0], [1], [0, 0, 1, 1], [], []>} : vector<2x16xbf16>, vector<16x64xbf16>, vector<2x64xf32> -> vector<2x64xf32>
    %c0_8 = arith.constant 0 : index
    %c0_9 = arith.constant 0 : index
    %8 = vector.load %arg5[%c0_8, %c0_9] : memref<1x64xf32, #tpu.memory_space<vmem>>, vector<1x64xf32>
    %9 = vector.broadcast %8 : vector<1x64xf32> to vector<2x64xf32>
    %10 = arith.addf %7, %9 : vector<2x64xf32>
    %11 = math.tanh %5 : vector<2x64xf32>
    %cst_10 = arith.constant 5.000000e-01 : f32
    %12 = vector.broadcast %cst_10 : f32 to vector<2x64xf32>
    %13 = arith.mulf %12, %10 : vector<2x64xf32>
    %14 = math.tanh %13 : vector<2x64xf32>
    %cst_11 = arith.constant 1.000000e+00 : f32
    %15 = vector.broadcast %cst_11 : f32 to vector<2x64xf32>
    %16 = arith.addf %15, %14 : vector<2x64xf32>
    %cst_12 = arith.constant 5.000000e-01 : f32
    %17 = vector.broadcast %cst_12 : f32 to vector<2x64xf32>
    %18 = arith.mulf %17, %16 : vector<2x64xf32>
    %19 = arith.mulf %11, %18 : vector<2x64xf32>
    %c0_13 = arith.constant 0 : index
    %c0_14 = arith.constant 0 : index
    %20 = vector.load %arg6[%c0_13, %c0_14] : memref<1x64xf32, #tpu.memory_space<vmem>>, vector<1x64xf32>
    %21 = vector.broadcast %20 : vector<1x64xf32> to vector<2x64xf32>
    %22 = arith.mulf %19, %21 : vector<2x64xf32>
    %c0_15 = arith.constant 0 : index
    %c0_16 = arith.constant 0 : index
    %23 = vector.load %arg7[%c0_15, %c0_16] : memref<2x64xf32, #tpu.memory_space<vmem>>, vector<2x64xf32>
    tpu.vector_store %arg7[%c0_15, %c0_16], %22 {strides = array<i32>} : memref<2x64xf32, #tpu.memory_space<vmem>>, vector<2x64xf32>,
    return
  }
  func.func @transform_0(%arg0: i32) -> (i32, i32) {
    %c0_i32 = arith.constant 0 : i32
    %c0_i32_0 = arith.constant 0 : i32
    %c0_i32_1 = arith.constant 0 : i32
    return %c0_i32, %c0_i32_0 : i32, i32
  }
  func.func @transform_1(%arg0: i32) -> (i32, i32) {
    %c0_i32 = arith.constant 0 : i32
    %c0_i32_0 = arith.constant 0 : i32
    return %c0_i32, %arg0 : i32, i32
  }
  func.func @transform_2(%arg0: i32) -> (i32, i32) {
    %c0_i32 = arith.constant 0 : i32
    %c0_i32_0 = arith.constant 0 : i32
    return %c0_i32, %arg0 : i32, i32
  }
  func.func @transform_3(%arg0: i32) -> (i32, i32) {
    %c0_i32 = arith.constant 0 : i32
    %c0_i32_0 = arith.constant 0 : i32
    return %c0_i32, %arg0 : i32, i32
  }
  func.func @transform_4(%arg0: i32) -> (i32, i32) {
    %c0_i32 = arith.constant 0 : i32
    %c0_i32_0 = arith.constant 0 : i32
    return %c0_i32, %arg0 : i32, i32
  }
  func.func @transform_5(%arg0: i32) -> (i32, i32) {
    %c0_i32 = arith.constant 0 : i32
    %c0_i32_0 = arith.constant 0 : i32
    return %c0_i32, %arg0 : i32, i32
  }
  func.func @transform_6(%arg0: i32) -> (i32, i32) {
    %c0_i32 = arith.constant 0 : i32
    %c0_i32_0 = arith.constant 0 : i32
    return %c0_i32, %arg0 : i32, i32
  }
}

</mosaic_0001>

<llo_original>
// kernel: tpu_custom_call.1
$region0: #{tpu_custom_call.1}
  #allocation0 [shape = 'u32[]', space=smem, size = 0x4, offset = 0x4, fixed_abs, tag = 'smem constant byte address 0x4 - core index']
  #allocation1 [shape = 'u32[72,128]{1,0:T(1,128)}', space=vmem, size = 0x9000, scoped, tag = 'internal scratch']
  %s0 = inlined_call_operand.hbm [shape: bf16[2,16], index: 0, kind: input, shape index: {}]
  %s1 = inlined_call_operand.hbm [shape: bf16[16,64], index: 1, kind: input, shape index: {}]
  %s2 = inlined_call_operand.vmem [shape: f32[1,64], index: 2, kind: input, shape index: {}]
  %s3 = inlined_call_operand.hbm [shape: bf16[16,64], index: 3, kind: input, shape index: {}]
  %s4 = inlined_call_operand.vmem [shape: f32[1,64], index: 4, kind: input, shape index: {}]
  %s5 = inlined_call_operand.vmem [shape: f32[1,64], index: 5, kind: input, shape index: {}]
  %s6 = inlined_call_operand.hbm [shape: f32[2,64], index: 6, kind: output, shape index: {}]
  %s7 = sld [smem:[#allocation0]]
  $region46: #{tpu_custom_call.1} parent=0
    _
  %s9 = ssub.s32 1, %s7
  %s10 = scalar_select 0, %s9, %s7
  $region1: #{tpu_custom_call.1} parent=0
    #allocation2 [shape = 'u8[512]{0}', space=vmem, size = 0x400, scoped, tag = 'input window, operand 0, single buffered']
    #allocation3 [shape = 's32[1]{0}', space=sflag, size = 0x4, scoped, tag = 'scoped memory for tpu_custom_call.1']
    #allocation4 [shape = 's32[1]{0}', space=sflag, size = 0x4, scoped, tag = 'scoped memory for tpu_custom_call.1']
    #allocation5 [shape = 'u8[4096]{0}', space=vmem, size = 0x1000, scoped, tag = 'input window, operand 1, single buffered']
    #allocation6 [shape = 's32[1]{0}', space=sflag, size = 0x4, scoped, tag = 'scoped memory for tpu_custom_call.1']
    #allocation7 [shape = 'u8[4096]{0}', space=vmem, size = 0x1000, scoped, tag = 'input window, operand 3, single buffered']
    #allocation8 [shape = 'u8[1024]{0}', space=vmem, size = 0x400, scoped, tag = 'output window, operand 0, single buffered']
    %11 = vsyncpa [#allocation3], 0
    %12 = vsyncpa [#allocation6], 0
    %13 = vsyncpa [#allocation4], 0
    // Predicated region
    $region2: #{tpu_custom_call.1} parent=1 // pred_check
      _
    $region3: #{tpu_custom_call.1} parent=1 // pred_check_branch
      %15 = sbr.rel (0) target = $region5
    $region4: #{tpu_custom_call.1} parent=1 // pred_region
      %17 = vsyncadd [#allocation3], 0
      %s19 = sshll.u32 %s0, 4
      %s20 = int_to_ptr.hbm [resolvable:$true] %s19
      %s21 = sshll.u32 [#allocation2], 4
      %s22 = int_to_ptr.vmem [resolvable:$true] %s21
      %24 = dma.hbm_to_vmem [thread:$0]  %s20, 16, %s22, [#allocation3]
    $region5: #{tpu_custom_call.1} parent=1 // pred_fallthru
      _
    // Predicated region
    $region6: #{tpu_custom_call.1} parent=1 // pred_check
      _
    $region7: #{tpu_custom_call.1} parent=1 // pred_check_branch
      %26 = sbr.rel (0) target = $region9
    $region8: #{tpu_custom_call.1} parent=1 // pred_region
      %28 = vsyncadd [#allocation6], 0
      %s29 = sshll.u32 %s1, 4
      %s30 = int_to_ptr.hbm [resolvable:$true] %s29
      %s31 = sshll.u32 [#allocation5], 4
      %s32 = int_to_ptr.vmem [resolvable:$true] %s31
      %37 = dma.hbm_to_vmem [thread:$0]  %s30, 128, %s32, [#allocation6], 64, 64, 4
    $region9: #{tpu_custom_call.1} parent=1 // pred_fallthru
      _
    // Predicated region
    $region10: #{tpu_custom_call.1} parent=1 // pred_check
      _
    $region11: #{tpu_custom_call.1} parent=1 // pred_check_branch
      %39 = sbr.rel (0) target = $region13
    $region12: #{tpu_custom_call.1} parent=1 // pred_region
      _
    $region13: #{tpu_custom_call.1} parent=1 // pred_fallthru
      _
    // Predicated region
    $region14: #{tpu_custom_call.1} parent=1 // pred_check
      _
    $region15: #{tpu_custom_call.1} parent=1 // pred_check_branch
      %41 = sbr.rel (0) target = $region17
    $region16: #{tpu_custom_call.1} parent=1 // pred_region
      %43 = vsyncadd [#allocation6], 0
      %s44 = sshll.u32 %s3, 4
      %s45 = int_to_ptr.hbm [resolvable:$true] %s44
      %s46 = sshll.u32 [#allocation7], 4
      %s47 = int_to_ptr.vmem [resolvable:$true] %s46
      %52 = dma.hbm_to_vmem [thread:$0]  %s45, 128, %s47, [#allocation6], 64, 64, 4
    $region17: #{tpu_custom_call.1} parent=1 // pred_fallthru
      _
    // Predicated region
    $region18: #{tpu_custom_call.1} parent=1 // pred_check
      _
    $region19: #{tpu_custom_call.1} parent=1 // pred_check_branch
      %54 = sbr.rel (0) target = $region21
    $region20: #{tpu_custom_call.1} parent=1 // pred_region
      _
    $region21: #{tpu_custom_call.1} parent=1 // pred_fallthru
      _
    // Predicated region
    $region22: #{tpu_custom_call.1} parent=1 // pred_check
      _
    $region23: #{tpu_custom_call.1} parent=1 // pred_check_branch
      %56 = sbr.rel (0) target = $region25
    $region24: #{tpu_custom_call.1} parent=1 // pred_region
      _
    $region25: #{tpu_custom_call.1} parent=1 // pred_fallthru
      _
    // Predicated region
    $region26: #{tpu_custom_call.1} parent=1 // pred_check
      _
    $region27: #{tpu_custom_call.1} parent=1 // pred_check_branch
      %58 = sbr.rel (0) target = $region29
    $region28: #{tpu_custom_call.1} parent=1 // pred_region
      %60 = dma.done [#allocation3], 16
    $region29: #{tpu_custom_call.1} parent=1 // pred_fallthru
      _
    // Predicated region
    $region30: #{tpu_custom_call.1} parent=1 // pred_check
      _
    $region31: #{tpu_custom_call.1} parent=1 // pred_check_branch
      %62 = sbr.rel (0) target = $region33
    $region32: #{tpu_custom_call.1} parent=1 // pred_region
      %64 = dma.done [#allocation6], 128
    $region33: #{tpu_custom_call.1} parent=1 // pred_fallthru
      _
    // Predicated region
    $region34: #{tpu_custom_call.1} parent=1 // pred_check
      _
    $region35: #{tpu_custom_call.1} parent=1 // pred_check_branch
      %66 = sbr.rel (0) target = $region37
    $region36: #{tpu_custom_call.1} parent=1 // pred_region
      %68 = dma.done [#allocation6], 128
    $region37: #{tpu_custom_call.1} parent=1 // pred_fallthru
      _
    %v70 = vld [vmem:[#allocation2] sm:$0x1]
    %v71 = vld [vmem:[#allocation5] sm:$0xf]
    %v72 = vld [vmem:[#allocation5 + $0x4] sm:$0xf]
    %v73 = vld [vmem:[%s2] sm:$0x1]
    %v75 = vperm.slane %v73, 0
    %v79 = vunpack.c.l.b16 %v71
    %v80 = vunpack.c.l.b16 %v72
    %v81 = vpack.c.b16 %v80, %v79
    %vm83 = vcmask 130048
    %v85 = vsel %vm83, %v70, 0
    %87 = vmatpush.bf16.msra.mxu0 0
    %88 = vmatpush.bf16.msra.mxu0 0
    %89 = vmatpush.bf16.msra.mxu0 0
    %90 = vmatpush.bf16.msra.mxu0 0
    %91 = vmatpush.bf16.msra.mxu0 0
    %92 = vmatpush.bf16.msra.mxu0 0
    %93 = vmatpush.bf16.msra.mxu0 0
    %94 = vmatpush.bf16.msra.mxu0 %v81
    %95 = vmatmul.bf16.gmra.mxu0 %v85
    %v96 = vpop.f32.mrf.mxu0
    %v97 = vadd.f32 %v75, %v96
    %v98 = vpop.f32.mrf.mxu0
    %99 = vdwg.mxu0
    %v100 = vld [vmem:[#allocation7] sm:$0xf]
    %v101 = vld [vmem:[#allocation7 + $0x4] sm:$0xf]
    %v102 = vld [vmem:[%s4] sm:$0x1]
    %v104 = vperm.slane %v102, 0
    %v108 = vunpack.c.l.b16 %v100
    %v109 = vunpack.c.l.b16 %v101
    %v110 = vpack.c.b16 %v109, %v108
    %112 = vmatpush.bf16.msra.mxu0 0
    %113 = vmatpush.bf16.msra.mxu0 0
    %114 = vmatpush.bf16.msra.mxu0 0
    %115 = vmatpush.bf16.msra.mxu0 0
    %116 = vmatpush.bf16.msra.mxu0 0
    %117 = vmatpush.bf16.msra.mxu0 0
    %118 = vmatpush.bf16.msra.mxu0 0
    %119 = vmatpush.bf16.msra.mxu0 %v110
    %120 = vmatmul.bf16.gmra.mxu0 %v85
    %v121 = vpop.f32.mrf.mxu0
    %v122 = vadd.f32 %v104, %v121
    %v123 = vpop.f32.mrf.mxu0
    %124 = vdwg.mxu0
    %v125 = vtanh.pop %v97
    %v126 = vmul.f32 %v122, 0.5
    %v127 = vtanh.pop %v126
    %v128 = vadd.f32 %v127, 1.0
    %v129 = vmul.f32 %v128, 0.5
    %v130 = vmul.f32 %v125, %v129
    %v131 = vld [vmem:[%s5] sm:$0x1]
    %v133 = vperm.slane %v131, 0
    %v135 = vmul.f32 %v130, %v133
    %vm136 = vcmask 517120
    %137 = vst.msk [vmem:[#allocation8] sm:$0x3] %vm136, %v135
    // Predicated region
    $region38: #{tpu_custom_call.1} parent=1 // pred_check
      _
    $region39: #{tpu_custom_call.1} parent=1 // pred_check_branch
      %139 = sbr.rel (0) target = $region41
    $region40: #{tpu_custom_call.1} parent=1 // pred_region
      %141 = vsyncadd [#allocation4], 0
      %s143 = sshll.u32 [#allocation8], 4
      %s144 = int_to_ptr.vmem [resolvable:$true] %s143
      %s145 = sshll.u32 %s6, 4
      %s146 = int_to_ptr.hbm [resolvable:$true] %s145
      %148 = dma.vmem_to_hbm [thread:$0]  %s144, 32, %s146, [#allocation4]
    $region41: #{tpu_custom_call.1} parent=1 // pred_fallthru
      _
    // Predicated region
    $region42: #{tpu_custom_call.1} parent=1 // pred_check
      _
    $region43: #{tpu_custom_call.1} parent=1 // pred_check_branch
      %150 = sbr.rel (0) target = $region45
    $region44: #{tpu_custom_call.1} parent=1 // pred_region
      %152 = dma.done [#allocation4], 32
    $region45: #{tpu_custom_call.1} parent=1 // pred_fallthru
      _
    %153 = vsyncpa [#allocation3], 1
    %154 = vsyncpa [#allocation6], 1
    %155 = vsyncpa [#allocation4], 1

</llo_original>
